<compile_context>
chip_gen: v6e
topology: v6e:2x2x1
jax: 0.10.0
libtpu: 0.0.40
codegen_flags: <defaults>
</compile_context>

<pallas_src>
import numpy as np
import jax
import jax.numpy as jnp
from jax.experimental import pallas as pl
from jax.experimental.pallas import tpu as pltpu

_LANE = 128
_SUBLANE = 8


def _additive_noise_kernel(x_ref, noise_ref, scale_ref, o_ref):
    """One (TB, TD) tile: out = x + scale * noise (scale broadcast over lanes)."""
    x = x_ref[...].astype(jnp.float32)
    out = x + scale_ref[...] * noise_ref[...]          # (TB,1) * (TB,TD) -> (TB,TD)
    o_ref[...] = out.astype(o_ref.dtype)


def _round_up(n, m):
    return (n + m - 1) // m * m


def apply_additive_noise(x, scale, noise2d):
    """x: (B, ...) array, scale: (B,) f32, noise2d: (B, D) f32 with D = prod(x.shape[1:])."""
    orig_shape = x.shape
    B = x.shape[0]
    D = int(np.prod(x.shape[1:]))

    # --- choose tiling ------------------------------------------------------
    if B <= _SUBLANE:
        TB = B                       # block first dim == full array dim (allowed)
        B_pad = B
    else:
        TB = _SUBLANE * max(1, min(B // _SUBLANE, 4))   # 8..32 rows per tile
        B_pad = _round_up(B, TB)

    itemsize = 4                      # f32 noise dominates sizing
    target_bytes = 2 * 1024 * 1024    # ~2 MB per input tile (safe for v7x VMEM too)
    TD = max(_LANE, (target_bytes // (TB * itemsize)) // _LANE * _LANE)
    TD = min(TD, _round_up(D, _LANE))
    D_pad = _round_up(D, TD)

    # --- flatten + pad to lane-dense, tile-aligned shapes --------------------
    x2d = x.reshape(B, D)
    if B_pad != B or D_pad != D:
        x2d = jnp.pad(x2d, ((0, B_pad - B), (0, D_pad - D)))
        noise2d = jnp.pad(noise2d, ((0, B_pad - B), (0, D_pad - D)))
    scale2d = scale.astype(jnp.float32)
    if B_pad != B:
        scale2d = jnp.pad(scale2d, (0, B_pad - B))
    scale2d = scale2d.reshape(B_pad, 1)

    grid = (B_pad // TB, D_pad // TD)

    out = pl.pallas_call(
        _additive_noise_kernel,
        out_shape=jax.ShapeDtypeStruct((B_pad, D_pad), x.dtype),
        grid_spec=pl.GridSpec(
            grid=grid,
            in_specs=[
                pl.BlockSpec((TB, TD), lambda i, j: (i, j)),   # x tile
                pl.BlockSpec((TB, TD), lambda i, j: (i, j)),   # noise tile
                pl.BlockSpec((TB, 1), lambda i, j: (i, 0)),    # per-row scale
            ],
            out_specs=pl.BlockSpec((TB, TD), lambda i, j: (i, j)),
        ),
        compiler_params=pltpu.CompilerParams(
            dimension_semantics=("parallel", "parallel"),
        ),
    )(x2d, noise2d.astype(jnp.float32), scale2d)

    return out[:B, :D].reshape(orig_shape)


def additive_noise(x, max_scale, seed=0, training=True):
    """JAX/Pallas equivalent of AdditiveNoise(max_scale)(x)."""
    if not training:
        return x
    B = x.shape[0]
    D = int(np.prod(x.shape[1:]))
    k_scale, k_noise = jax.random.split(jax.random.PRNGKey(seed))
    scale = jax.random.uniform(k_scale, (B,), dtype=jnp.float32) * jnp.float32(max_scale)
    noise = jax.random.normal(k_noise, (B, D), dtype=jnp.float32)
    return apply_additive_noise(x, scale, noise)


if __name__ == "__main__":
    key = jax.random.PRNGKey(0)
    B, C, H, W = 2, 4, 16, 16
    x = jax.random.normal(key, (B, C, H, W), dtype=jnp.float32)

    max_scale = 1.0
    seed = 0

    y = jax.block_until_ready(additive_noise(x, max_scale, seed=seed, training=True))
    assert y.shape == x.shape and y.dtype == x.dtype
    assert bool(jnp.all(jnp.isfinite(y)))

    # Reference check: reproduce the same randomness and compare with pure jnp.
    k_scale, k_noise = jax.random.split(jax.random.PRNGKey(seed))
    scale_ref = jax.random.uniform(k_scale, (B,), dtype=jnp.float32) * jnp.float32(max_scale)
    noise_ref = jax.random.normal(k_noise, (B, C * H * W), dtype=jnp.float32)
    ref = x + scale_ref[:, None, None, None] * noise_ref.reshape(x.shape)
    assert bool(jnp.allclose(y, ref, atol=1e-5, rtol=1e-5))

    # Eval mode must be identity.
    y_eval = jax.block_until_ready(additive_noise(x, max_scale, training=False))
    assert bool(jnp.all(y_eval == x))

    print("KERNEL_OK")
</pallas_src>

<mosaic_0001>
module attributes {stable_mosaic.version = 11 : i64} {
  func.func @_additive_noise_kernel(%arg0: i32, %arg1: i32, %arg2: memref<2x1024xf32, #tpu.memory_space<vmem>>, %arg3: memref<2x1024xf32, #tpu.memory_space<vmem>>, %arg4: memref<2x1xf32, #tpu.memory_space<vmem>>, %arg5: memref<2x1024xf32, #tpu.memory_space<vmem>>) attributes {dimension_semantics = [#tpu.dimension_semantics<parallel>, #tpu.dimension_semantics<parallel>], iteration_bounds = array<i64: 1, 1>, scalar_prefetch = 0 : i64, scratch_operands = 0 : i64, tpu.core_type = #tpu.core_type<tc>, window_params = [{transform_indices = @transform_0, window_bounds = array<i64: 2, 1024>}, {transform_indices = @transform_1, window_bounds = array<i64: 2, 1024>}, {transform_indices = @transform_2, window_bounds = array<i64: 2, 1>}, {transform_indices = @transform_3, window_bounds = array<i64: 2, 1024>}]} {
    %c0 = arith.constant 0 : index
    %c0_0 = arith.constant 0 : index
    %0 = vector.load %arg2[%c0, %c0_0] : memref<2x1024xf32, #tpu.memory_space<vmem>>, vector<2x1024xf32>
    %c0_1 = arith.constant 0 : index
    %c0_2 = arith.constant 0 : index
    %1 = vector.load %arg4[%c0_1, %c0_2] : memref<2x1xf32, #tpu.memory_space<vmem>>, vector<2x1xf32>
    %c0_3 = arith.constant 0 : index
    %c0_4 = arith.constant 0 : index
    %2 = vector.load %arg3[%c0_3, %c0_4] : memref<2x1024xf32, #tpu.memory_space<vmem>>, vector<2x1024xf32>
    %3 = vector.broadcast %1 : vector<2x1xf32> to vector<2x1024xf32>
    %4 = arith.mulf %3, %2 : vector<2x1024xf32>
    %5 = arith.addf %0, %4 : vector<2x1024xf32>
    %c0_5 = arith.constant 0 : index
    %c0_6 = arith.constant 0 : index
    %6 = vector.load %arg5[%c0_5, %c0_6] : memref<2x1024xf32, #tpu.memory_space<vmem>>, vector<2x1024xf32>
    tpu.vector_store %arg5[%c0_5, %c0_6], %5 {strides = array<i32>} : memref<2x1024xf32, #tpu.memory_space<vmem>>, vector<2x1024xf32>,
    return
  }
  func.func @transform_0(%arg0: i32, %arg1: i32) -> (i32, i32) {
    %c0_i32 = arith.constant 0 : i32
    return %arg0, %arg1 : i32, i32
  }
  func.func @transform_1(%arg0: i32, %arg1: i32) -> (i32, i32) {
    %c0_i32 = arith.constant 0 : i32
    return %arg0, %arg1 : i32, i32
  }
  func.func @transform_2(%arg0: i32, %arg1: i32) -> (i32, i32) {
    %c0_i32 = arith.constant 0 : i32
    %c0_i32_0 = arith.constant 0 : i32
    return %arg0, %c0_i32 : i32, i32
  }
  func.func @transform_3(%arg0: i32, %arg1: i32) -> (i32, i32) {
    %c0_i32 = arith.constant 0 : i32
    return %arg0, %arg1 : i32, i32
  }
}

</mosaic_0001>

<llo_original>
// kernel: tpu_custom_call.1
$region0: #{tpu_custom_call.1}
  #allocation0 [shape = 'u32[]', space=smem, size = 0x4, offset = 0x4, fixed_abs, tag = 'smem constant byte address 0x4 - core index']
  #allocation1 [shape = 'u32[144,128]{1,0:T(1,128)}', space=vmem, size = 0x12000, scoped, tag = 'internal scratch']
  %s0 = inlined_call_operand.hbm [shape: f32[2,1024], index: 0, kind: input, shape index: {}]
  %s1 = inlined_call_operand.hbm [shape: f32[2,1024], index: 1, kind: input, shape index: {}]
  %s2 = inlined_call_operand.vmem [shape: f32[2,1], index: 2, kind: input, shape index: {}]
  %s3 = inlined_call_operand.hbm [shape: f32[2,1024], index: 3, kind: output, shape index: {}]
  %s4 = sld [smem:[#allocation0]]
  $region30: #{tpu_custom_call.1} parent=0
    _
  %s6 = ssub.s32 1, %s4
  %s7 = scalar_select 0, %s6, %s4
  $region1: #{tpu_custom_call.1} parent=0
    #allocation2 [shape = 'u8[8192]{0}', space=vmem, size = 0x2000, scoped, tag = 'input window, operand 0, single buffered']
    #allocation3 [shape = 's32[1]{0}', space=sflag, size = 0x4, scoped, tag = 'scoped memory for tpu_custom_call.1']
    #allocation4 [shape = 's32[1]{0}', space=sflag, size = 0x4, scoped, tag = 'scoped memory for tpu_custom_call.1']
    #allocation5 [shape = 'u8[8192]{0}', space=vmem, size = 0x2000, scoped, tag = 'input window, operand 1, single buffered']
    #allocation6 [shape = 's32[1]{0}', space=sflag, size = 0x4, scoped, tag = 'scoped memory for tpu_custom_call.1']
    #allocation7 [shape = 'u8[8192]{0}', space=vmem, size = 0x2000, scoped, tag = 'output window, operand 0, single buffered']
    %8 = vsyncpa [#allocation3], 0
    %9 = vsyncpa [#allocation6], 0
    %10 = vsyncpa [#allocation4], 0
    // Predicated region
    $region2: #{tpu_custom_call.1} parent=1 // pred_check
      _
    $region3: #{tpu_custom_call.1} parent=1 // pred_check_branch
      %12 = sbr.rel (0) target = $region5
    $region4: #{tpu_custom_call.1} parent=1 // pred_region
      %s14 = ssub.s32 256, 256
      %15 = vsyncadd [#allocation3], %s14
      %s17 = sshll.u32 [#allocation2], 4
      %s18 = int_to_ptr.vmem [resolvable:$true] %s17
      %20 = dma.hbm_to_vmem [thread:$0]  %s0, 256, %s18, [#allocation3]
    $region5: #{tpu_custom_call.1} parent=1 // pred_fallthru
      _
    // Predicated region
    $region6: #{tpu_custom_call.1} parent=1 // pred_check
      _
    $region7: #{tpu_custom_call.1} parent=1 // pred_check_branch
      %22 = sbr.rel (0) target = $region9
    $region8: #{tpu_custom_call.1} parent=1 // pred_region
      %s24 = ssub.s32 256, 256
      %25 = vsyncadd [#allocation6], %s24
      %s27 = sshll.u32 [#allocation5], 4
      %s28 = int_to_ptr.vmem [resolvable:$true] %s27
      %30 = dma.hbm_to_vmem [thread:$0]  %s1, 256, %s28, [#allocation6]
    $region9: #{tpu_custom_call.1} parent=1 // pred_fallthru
      _
    // Predicated region
    $region10: #{tpu_custom_call.1} parent=1 // pred_check
      _
    $region11: #{tpu_custom_call.1} parent=1 // pred_check_branch
      %32 = sbr.rel (0) target = $region13
    $region12: #{tpu_custom_call.1} parent=1 // pred_region
      _
    $region13: #{tpu_custom_call.1} parent=1 // pred_fallthru
      _
    // Predicated region
    $region14: #{tpu_custom_call.1} parent=1 // pred_check
      _
    $region15: #{tpu_custom_call.1} parent=1 // pred_check_branch
      %34 = sbr.rel (0) target = $region17
    $region16: #{tpu_custom_call.1} parent=1 // pred_region
      %35 = dma.done [#allocation3], 256
    $region17: #{tpu_custom_call.1} parent=1 // pred_fallthru
      _
    // Predicated region
    $region18: #{tpu_custom_call.1} parent=1 // pred_check
      _
    $region19: #{tpu_custom_call.1} parent=1 // pred_check_branch
      %37 = sbr.rel (0) target = $region21
    $region20: #{tpu_custom_call.1} parent=1 // pred_region
      %38 = dma.done [#allocation6], 256
    $region21: #{tpu_custom_call.1} parent=1 // pred_fallthru
      _
    %v39 = vld [vmem:[#allocation2] sm:$0xff]
    %v40 = vld [vmem:[#allocation2 + $0x8] sm:$0xff]
    %v41 = vld [vmem:[%s2] sm:$0x3]
    %v42 = vld [vmem:[#allocation5] sm:$0xff]
    %v43 = vld [vmem:[#allocation5 + $0x8] sm:$0xff]
    %45 = vset.pattern.permute.xlu0 0
    %46 = vperm.xlu0 %45, %v41
    %v47 = vpop.permute.xlu0 %46
    %v51 = vcombine.high %v42, %v42
    %v53 = vunpack.c.l.s4 1983009808
    %v54 = vunpack.c.0.s8 %v53
    %v55 = vlaneseq
    %v56 = vshrl.u32 %v55, 7
    %v57 = vsub.s32 %v54, %v56
    %v58 = vrot.slane %v42, %v57
    %v60 = vunpack.c.l.s4 1983009808
    %v61 = vunpack.c.0.s8 %v60
    %v62 = vlaneseq
    %v63 = vshrl.u32 %v62, 7
    %v64 = vsub.s32 %v61, %v63
    %v65 = vrot.slane %v51, %v64
    %v66 = vcombine.high %v58, %v58
    %v67 = vcombine.high %v65, %v65
    %v68 = vcombine.high %v43, %v43
    %v70 = vunpack.c.l.s4 1983009808
    %v71 = vunpack.c.0.s8 %v70
    %v72 = vlaneseq
    %v73 = vshrl.u32 %v72, 7
    %v74 = vsub.s32 %v71, %v73
    %v75 = vrot.slane %v43, %v74
    %v77 = vunpack.c.l.s4 1983009808
    %v78 = vunpack.c.0.s8 %v77
    %v79 = vlaneseq
    %v80 = vshrl.u32 %v79, 7
    %v81 = vsub.s32 %v78, %v80
    %v82 = vrot.slane %v68, %v81
    %v83 = vcombine.high %v75, %v75
    %v84 = vcombine.high %v82, %v82
    %v93 = vmul.f32 %v47, %v58
    %v94 = vmul.f32 %v47, %v66
    %v95 = vmul.f32 %v47, %v65
    %v96 = vmul.f32 %v47, %v67
    %v97 = vmul.f32 %v47, %v75
    %v98 = vmul.f32 %v47, %v83
    %v99 = vmul.f32 %v47, %v82
    %v100 = vmul.f32 %v47, %v84
    %v109 = vcombine.low %v93, %v94
    %v110 = vcombine.low %v95, %v96
    %v112 = vunpack.c.l.s4 1983009808
    %v113 = vunpack.c.0.s8 %v112
    %v114 = vlaneseq
    %v115 = vshrl.u32 %v114, 7
    %v116 = vsub.s32 %v113, %v115
    %v117 = vrot.slane %v109, %v116
    %v119 = vunpack.c.l.s4 1983009808
    %v120 = vunpack.c.0.s8 %v119
    %v121 = vlaneseq
    %v122 = vshrl.u32 %v121, 7
    %v123 = vsub.s32 %v120, %v122
    %v124 = vrot.slane %v110, %v123
    %v125 = vcombine.low %v117, %v124
    %v126 = vcombine.low %v97, %v98
    %v127 = vcombine.low %v99, %v100
    %v129 = vunpack.c.l.s4 1983009808
    %v130 = vunpack.c.0.s8 %v129
    %v131 = vlaneseq
    %v132 = vshrl.u32 %v131, 7
    %v133 = vsub.s32 %v130, %v132
    %v134 = vrot.slane %v126, %v133
    %v136 = vunpack.c.l.s4 1983009808
    %v137 = vunpack.c.0.s8 %v136
    %v138 = vlaneseq
    %v139 = vshrl.u32 %v138, 7
    %v140 = vsub.s32 %v137, %v139
    %v141 = vrot.slane %v127, %v140
    %v142 = vcombine.low %v134, %v141
    %v145 = vadd.f32 %v39, %v125
    %v146 = vadd.f32 %v40, %v142
    %147 = vst [vmem:[#allocation7] sm:$0xff] %v145
    %148 = vst [vmem:[#allocation7 + $0x8] sm:$0xff] %v146
    // Predicated region
    $region22: #{tpu_custom_call.1} parent=1 // pred_check
      _
    $region23: #{tpu_custom_call.1} parent=1 // pred_check_branch
      %150 = sbr.rel (0) target = $region25
    $region24: #{tpu_custom_call.1} parent=1 // pred_region
      %s152 = ssub.s32 256, 256
      %153 = vsyncadd [#allocation4], %s152
      %s155 = sshll.u32 [#allocation7], 4
      %s156 = int_to_ptr.vmem [resolvable:$true] %s155
      %158 = dma.vmem_to_hbm [thread:$0]  %s156, 256, %s3, [#allocation4]
    $region25: #{tpu_custom_call.1} parent=1 // pred_fallthru
      _
    // Predicated region
    $region26: #{tpu_custom_call.1} parent=1 // pred_check
      _
    $region27: #{tpu_custom_call.1} parent=1 // pred_check_branch
      %160 = sbr.rel (0) target = $region29
    $region28: #{tpu_custom_call.1} parent=1 // pred_region
      %161 = dma.done [#allocation4], 256
    $region29: #{tpu_custom_call.1} parent=1 // pred_fallthru
      _
    %162 = vsyncpa [#allocation3], 1
    %163 = vsyncpa [#allocation6], 1
    %164 = vsyncpa [#allocation4], 1

</llo_original>
